<compile_context>
chip_gen: v7x
topology: tpu7x:2x2x1
jax: 0.10.0
libtpu: 0.0.40
codegen_flags: <defaults>
</compile_context>

<pallas_src>
import jax
import jax.numpy as jnp
from jax.experimental import pallas as pl
from jax.experimental.pallas import tpu as pltpu

D_in = 32
D_out = 32

LANE = 128       # vreg lane width  (last dim)
SUBLANE = 8      # vreg sublane width (second-to-last dim, f32)
FOLD = 4         # 4 * D_in == 128 -> lane-dense folded layout

_SMALL_B = 1024       # linear: single-block fast path below this batch
_SMALL_ROWS = 1024    # add_one: single-block fast path below this many 128-rows
_TILE_B_FOLDED = 1024  # folded linear batch tile (512 KiB x 2 buffers per array)
_TILE_R_ADD = 2048     # add_one row tile (1 MiB per buffer)


def _round_up(n, m):
    return ((n + m - 1) // m) * m


# ---- Pallas kernels ---------------------------------------------------------

def _add_one_kernel(x_ref, o_ref):
    # condition == True branch: out = x + 1  (lane-dense tile)
    o_ref[...] = x_ref[...] + jnp.asarray(1.0, x_ref.dtype)


def _linear_kernel(x_ref, w_ref, b_ref, o_ref):
    # condition == False branch: out = x @ W + b   (nn.Linear)
    # f32 accumulation on the MXU; W/b are grid-resident (constant index_map).
    acc = jnp.dot(x_ref[...], w_ref[...], preferred_element_type=jnp.float32)
    o_ref[...] = (acc + b_ref[...]).astype(o_ref.dtype)


# ---- Wrappers ---------------------------------------------------------------

def add_one(x):
    """x + 1 over a flat lane-dense view.  No pad / slice in the common case."""
    orig_shape = x.shape
    dtype = x.dtype
    flat = x.reshape(-1)            # free view for contiguous x
    n = flat.shape[0]

    if n % LANE == 0:
        rows = n // LANE
        x2d = flat.reshape(rows, LANE)     # free view

        if rows <= _SMALL_ROWS:
            tile_r = rows                  # one full-array block, no grid cost
            grid = 1
        else:
            # >= 2 grid steps so v7x's two TensorCores both get work.
            tile_r = min(_TILE_R_ADD, _round_up(pl.cdiv(rows, 2), SUBLANE))
            grid = pl.cdiv(rows, tile_r)   # ragged tail clipped by Pallas

        out2d = pl.pallas_call(
            _add_one_kernel,
            out_shape=jax.ShapeDtypeStruct((rows, LANE), dtype),
            grid=(grid,),
            in_specs=[pl.BlockSpec((tile_r, LANE), lambda i: (i, 0))],
            out_specs=pl.BlockSpec((tile_r, LANE), lambda i: (i, 0)),
            # TODO(synk): only a true in-place win if the caller donates x at a
            # jit boundary; harmless otherwise.
            input_output_aliases={0: 0},
            compiler_params=pltpu.CompilerParams(
                dimension_semantics=("parallel",)),
        )(x2d)
        return out2d.reshape(orig_shape)

    # Rare fallback: element count not a multiple of 128.
    if n <= (1 << 20):
        # Single (1, n) block -- full-extent dims are legal, still no pad.
        out = pl.pallas_call(
            _add_one_kernel,
            out_shape=jax.ShapeDtypeStruct((1, n), dtype),
            in_specs=[pl.BlockSpec((1, n), lambda: (0, 0))],
            out_specs=pl.BlockSpec((1, n), lambda: (0, 0)),
        )(flat.reshape(1, n))
        return out.reshape(orig_shape)

    # Large and ragged: pad to a lane multiple (extra HBM pass, rare case).
    n_pad = _round_up(n, LANE)
    rows = n_pad // LANE
    tile_r = min(_TILE_R_ADD, _round_up(pl.cdiv(rows, 2), SUBLANE))
    grid = pl.cdiv(rows, tile_r)
    x2d = jnp.pad(flat, (0, n_pad - n)).reshape(rows, LANE)
    out2d = pl.pallas_call(
        _add_one_kernel,
        out_shape=jax.ShapeDtypeStruct((rows, LANE), dtype),
        grid=(grid,),
        in_specs=[pl.BlockSpec((tile_r, LANE), lambda i: (i, 0))],
        out_specs=pl.BlockSpec((tile_r, LANE), lambda i: (i, 0)),
        compiler_params=pltpu.CompilerParams(
            dimension_semantics=("parallel",)),
    )(x2d)
    return out2d.reshape(-1)[:n].reshape(orig_shape)


def linear(x, params):
    """x @ W + b at true feature width (no padded HBM bytes).

    Small / ragged batches: single- or few-block call on the raw (B, 32)
    arrays.  Large batches with B % 4 == 0: batch-fold 4 rows into the
    128-lane dim and use the precomputed block-diagonal 128x128 W, so every
    load/store is a full unmasked 128-lane access.
    """
    w, b = params["w"], params["b"]
    B, Din = x.shape
    Dout = w.shape[1]

    if B <= _SMALL_B or (B % FOLD) != 0:
        if B <= _SMALL_B:
            tile_b = B                     # one block: B equals the full dim
            grid = 1
        else:
            tile_b = min(_TILE_B_FOLDED, _round_up(pl.cdiv(B, 2), SUBLANE))
            grid = pl.cdiv(B, tile_b)      # ragged tail clipped by Pallas
        return pl.pallas_call(
            _linear_kernel,
            out_shape=jax.ShapeDtypeStruct((B, Dout), x.dtype),
            grid=(grid,),
            in_specs=[
                pl.BlockSpec((tile_b, Din), lambda i: (i, 0)),   # x: batch-tiled
                pl.BlockSpec((Din, Dout), lambda i: (0, 0)),     # W: resident
                pl.BlockSpec((1, Dout), lambda i: (0, 0)),       # b: resident
            ],
            out_specs=pl.BlockSpec((tile_b, Dout), lambda i: (i, 0)),
            compiler_params=pltpu.CompilerParams(
                dimension_semantics=("parallel",)),
        )(x, w, b)

    # Lane-dense batch-folded path (B % 4 == 0, B > _SMALL_B).
    w_f, b_f = params["w_fold"], params["b_fold"]
    Bf = B // FOLD
    x_f = x.reshape(Bf, FOLD * Din)        # free, contiguous view
    tile_b = min(_TILE_B_FOLDED, _round_up(pl.cdiv(Bf, 2), SUBLANE))
    grid = pl.cdiv(Bf, tile_b)             # >= 2 steps -> both v7x TCs busy

    out_f = pl.pallas_call(
        _linear_kernel,
        out_shape=jax.ShapeDtypeStruct((Bf, FOLD * Dout), x.dtype),
        grid=(grid,),
        in_specs=[
            pl.BlockSpec((tile_b, FOLD * Din), lambda i: (i, 0)),       # x folded
            pl.BlockSpec((FOLD * Din, FOLD * Dout), lambda i: (0, 0)),  # W block-diag
            pl.BlockSpec((1, FOLD * Dout), lambda i: (0, 0)),           # b tiled
        ],
        out_specs=pl.BlockSpec((tile_b, FOLD * Dout), lambda i: (i, 0)),
        compiler_params=pltpu.CompilerParams(
            dimension_semantics=("parallel",)),
    )(x_f, w_f, b_f)
    return out_f.reshape(B, Dout)          # free view back to (B, Dout)


def simpel_model_forward(x, condition, params):
    """Mirrors simpel_model.forward: Python-level branch on a static bool.

    Note: `condition` must stay a static Python bool (as in the PyTorch
    module).  If it ever becomes a traced JAX value, switch to lax.cond.
    """
    if condition:
        return add_one(x)
    else:
        return linear(x, params)


def init_params(key):
    # Deterministic init mimicking nn.Linear default (uniform +-1/sqrt(D_in)).
    kw, kb = jax.random.split(key)
    bound = 1.0 / jnp.sqrt(jnp.asarray(D_in, jnp.float32))
    # Stored as [D_in, D_out] (transpose of PyTorch's [D_out, D_in]).
    w = jax.random.uniform(kw, (D_in, D_out), jnp.float32, -bound, bound)
    b = jax.random.uniform(kb, (1, D_out), jnp.float32, -bound, bound)
    # Precomputed ONCE: block-diagonal W (kron(I4, W)) and 4x-tiled bias for
    # the lane-dense batch-folded path.  No per-call padding.
    w_fold = jnp.kron(jnp.eye(FOLD, dtype=w.dtype), w)        # (128, 128)
    b_fold = jnp.tile(b, (1, FOLD))                            # (1, 128)
    return {"w": w, "b": b, "w_fold": w_fold, "b_fold": b_fold}


if __name__ == "__main__":
    key = jax.random.PRNGKey(0)
    kx, kp = jax.random.split(key)

    B = 8
    x = jax.random.normal(kx, (B, D_in), jnp.float32)
    params = init_params(kp)

    # condition == True branch (small / fast path)
    out_true = jax.block_until_ready(simpel_model_forward(x, True, params))
    # condition == False branch (small / fast path)
    out_false = jax.block_until_ready(simpel_model_forward(x, False, params))

    ref_true = x + 1.0
    ref_false = x @ params["w"] + params["b"]
    assert out_true.shape == (B, D_out) and out_false.shape == (B, D_out)
    assert jnp.allclose(out_true, ref_true, atol=1e-6), "add branch mismatch"
    assert jnp.allclose(out_false, ref_false, atol=1e-5), "linear branch mismatch"

    # Also exercise the large-batch, lane-dense folded path.
    B2 = 2048
    x2 = jax.random.normal(kx, (B2, D_in), jnp.float32)
    out2_false = jax.block_until_ready(simpel_model_forward(x2, False, params))
    out2_true = jax.block_until_ready(simpel_model_forward(x2, True, params))
    assert jnp.allclose(out2_false, x2 @ params["w"] + params["b"], atol=1e-5), \
        "folded linear mismatch"
    assert jnp.allclose(out2_true, x2 + 1.0, atol=1e-6), "large add mismatch"

    print("KERNEL_OK")
</pallas_src>

<mosaic_0001>
module attributes {stable_mosaic.version = 11 : i64} {
  func.func @_add_one_kernel(%arg0: i32, %arg1: memref<2x128xf32, #tpu.memory_space<vmem>>, %arg2: memref<2x128xf32, #tpu.memory_space<vmem>>) attributes {dimension_semantics = [#tpu.dimension_semantics<parallel>], iteration_bounds = array<i64: 1>, scalar_prefetch = 0 : i64, scratch_operands = 0 : i64, tpu.core_type = #tpu.core_type<tc>, window_params = [{transform_indices = @transform_0, window_bounds = array<i64: 2, 128>}, {transform_indices = @transform_1, window_bounds = array<i64: 2, 128>}]} {
    %c0 = arith.constant 0 : index
    %c0_0 = arith.constant 0 : index
    %0 = vector.load %arg1[%c0, %c0_0] : memref<2x128xf32, #tpu.memory_space<vmem>>, vector<2x128xf32>
    %cst = arith.constant 1.000000e+00 : f32
    %1 = vector.broadcast %cst : f32 to vector<2x128xf32>
    %2 = arith.addf %0, %1 : vector<2x128xf32>
    %c0_1 = arith.constant 0 : index
    %c0_2 = arith.constant 0 : index
    %3 = vector.load %arg2[%c0_1, %c0_2] : memref<2x128xf32, #tpu.memory_space<vmem>>, vector<2x128xf32>
    tpu.vector_store %arg2[%c0_1, %c0_2], %2 {strides = array<i32>} : memref<2x128xf32, #tpu.memory_space<vmem>>, vector<2x128xf32>,
    return
  }
  func.func @transform_0(%arg0: i32) -> (i32, i32) {
    %c0_i32 = arith.constant 0 : i32
    %c0_i32_0 = arith.constant 0 : i32
    return %arg0, %c0_i32 : i32, i32
  }
  func.func @transform_1(%arg0: i32) -> (i32, i32) {
    %c0_i32 = arith.constant 0 : i32
    %c0_i32_0 = arith.constant 0 : i32
    return %arg0, %c0_i32 : i32, i32
  }
}

</mosaic_0001>

<llo_original>
// kernel: tpu_custom_call.1
$region0: #{tpu_custom_call.1}
  #allocation0 [shape = 'u32[]', space=smem, size = 0x4, offset = 0x4, fixed_abs, tag = 'smem constant byte address 0x4 - core index']
  #allocation1 [shape = 'u32[144,128]{1,0:T(1,128)}', space=vmem, size = 0x12000, scoped, tag = 'internal scratch']
  %s0 = inlined_call_operand.hbm [shape: f32[2,128], index: 0, kind: input, shape index: {}, may-alias: {0,1}]
  %s1 = inlined_call_operand.hbm [shape: f32[2,128], index: 1, kind: output, shape index: {}, may-alias: {0,1}]
  %s2 = sld [smem:[#allocation0]]
  $region18: #{tpu_custom_call.1} parent=0
    _
  %s4 = ssub.s32 1, %s2
  %s5 = scalar_select 0, %s4, %s2
  $region1: #{tpu_custom_call.1} parent=0
    #allocation2 [shape = 'u8[1024]{0}', space=vmem, size = 0x400, scoped, tag = 'input window, operand 0, single buffered']
    #allocation3 [shape = 's32[1]{0}', space=sflag, size = 0x4, scoped, tag = 'scoped memory for tpu_custom_call.1']
    #allocation4 [shape = 's32[1]{0}', space=sflag, size = 0x4, scoped, tag = 'scoped memory for tpu_custom_call.1']
    #allocation5 [shape = 'u8[1024]{0}', space=vmem, size = 0x400, scoped, tag = 'output window, operand 0, single buffered']
    %6 = vsyncpa [#allocation3], 0
    %7 = vsyncpa [#allocation4], 0
    // Predicated region
    $region2: #{tpu_custom_call.1} parent=1 // pred_check
      _
    $region3: #{tpu_custom_call.1} parent=1 // pred_check_branch
      %9 = sbr.rel (0) target = $region5
    $region4: #{tpu_custom_call.1} parent=1 // pred_region
      %s11 = ssub.s32 32, 32
      %12 = vsyncadd [#allocation3], %s11
      %s14 = sshll.u32 [#allocation2], 4
      %s15 = int_to_ptr.vmem [resolvable:$true] %s14
      %17 = dma.hbm_to_vmem [thread:$0]  %s0, 32, %s15, [#allocation3]
    $region5: #{tpu_custom_call.1} parent=1 // pred_fallthru
      _
    // Predicated region
    $region6: #{tpu_custom_call.1} parent=1 // pred_check
      _
    $region7: #{tpu_custom_call.1} parent=1 // pred_check_branch
      %19 = sbr.rel (0) target = $region9
    $region8: #{tpu_custom_call.1} parent=1 // pred_region
      %20 = dma.done [#allocation3], 32
    $region9: #{tpu_custom_call.1} parent=1 // pred_fallthru
      _
    %v21 = vld [vmem:[#allocation2] sm:$0x3]
    %v22 = vadd.f32 %v21, 1.0
    %23 = vst [vmem:[#allocation5] sm:$0x3] %v22
    // Predicated region
    $region10: #{tpu_custom_call.1} parent=1 // pred_check
      _
    $region11: #{tpu_custom_call.1} parent=1 // pred_check_branch
      %25 = sbr.rel (0) target = $region13
    $region12: #{tpu_custom_call.1} parent=1 // pred_region
      %s27 = ssub.s32 32, 32
      %28 = vsyncadd [#allocation4], %s27
      %s30 = sshll.u32 [#allocation5], 4
      %s31 = int_to_ptr.vmem [resolvable:$true] %s30
      %33 = dma.vmem_to_hbm [thread:$0]  %s31, 32, %s1, [#allocation4]
    $region13: #{tpu_custom_call.1} parent=1 // pred_fallthru
      _
    // Predicated region
    $region14: #{tpu_custom_call.1} parent=1 // pred_check
      _
    $region15: #{tpu_custom_call.1} parent=1 // pred_check_branch
      %35 = sbr.rel (0) target = $region17
    $region16: #{tpu_custom_call.1} parent=1 // pred_region
      %36 = dma.done [#allocation4], 32
    $region17: #{tpu_custom_call.1} parent=1 // pred_fallthru
      _
    %37 = vsyncpa [#allocation3], 1
    %38 = vsyncpa [#allocation4], 1

</llo_original>
